<compile_context>
chip_gen: v6e
topology: v6e:2x2x1
jax: 0.10.0
libtpu: 0.0.40
codegen_flags: <defaults>
</compile_context>

<pallas_src>
import jax
import jax.numpy as jnp
from jax.experimental import pallas as pl
from jax.experimental.pallas import tpu as pltpu


def _round_up(x, m):
    return ((x + m - 1) // m) * m


# ------------------------- generation-aware tiling ---------------------------

def _tile_caps(use_bf16=False):
    """Tile-size caps + VMEM limit, chosen per TPU generation."""
    kind = ""
    try:
        kind = jax.devices()[0].device_kind.lower()
    except Exception:
        pass
    if ("v5" in kind) or ("v6" in kind):
        # 128 MiB VMEM: big tiles cut HBM re-fetch (x re-read Np/tn times etc.)
        tm_cap, tn_cap, tk_cap = 512, 512, 1024
        vmem_limit = 96 * 1024 * 1024
    else:
        # v7x (64 MiB VMEM per TensorCore) or unknown: stay conservative.
        tm_cap, tn_cap, tk_cap = 512, 512, 512
        vmem_limit = 48 * 1024 * 1024
    if use_bf16:
        tk_cap *= 2  # bf16 halves operand tile bytes; spend it on K.
    return tm_cap, tn_cap, tk_cap, vmem_limit


def _plan_nk(in_f, out_f, use_bf16):
    """N/K tiling plan (batch-independent, so it can be computed at init)."""
    tm_cap, tn_cap, tk_cap, vmem_limit = _tile_caps(use_bf16)
    tn = min(tn_cap, _round_up(out_f, 128))
    tk = min(tk_cap, _round_up(in_f, 128))
    Np = _round_up(out_f, tn)
    Kp = _round_up(in_f, tk)
    return tm_cap, tn, tk, Np, Kp, vmem_limit


# ------------------------------ Pallas kernels -------------------------------

def _make_gemm_kernel(has_bias, acc_in_out):
    """Tiled GEMM kernel: K innermost, resident accumulator, pl.when init/finalize.

    If acc_in_out, the f32 output block itself (index (i,j) constant across k,
    hence VMEM-resident) is used as the accumulator and no scratch is needed.
    """
    def kernel(*refs):
        x_ref, w_ref = refs[0], refs[1]
        idx = 2
        b_ref = None
        if has_bias:
            b_ref = refs[idx]
            idx += 1
        o_ref = refs[idx]
        idx += 1
        acc_ref = o_ref if acc_in_out else refs[idx]

        k = pl.program_id(2)

        @pl.when(k == 0)
        def _():
            acc_ref[...] = jnp.zeros_like(acc_ref)

        # Standard (tm,tk)@(tk,tn) MXU matmul (weight pre-transposed outside).
        acc_ref[...] += jnp.dot(x_ref[...], w_ref[...],
                                preferred_element_type=jnp.float32)

        if has_bias or (not acc_in_out):
            @pl.when(k == pl.num_programs(2) - 1)
            def _():
                res = acc_ref[...]
                if has_bias:
                    res = res + b_ref[...].astype(jnp.float32)
                o_ref[...] = res.astype(o_ref.dtype)

    return kernel


def _make_single_tile_kernel(has_bias):
    """Whole-problem-in-one-tile kernel (no grid loop, no padding)."""
    def kernel(*refs):
        if has_bias:
            x_ref, w_ref, b_ref, o_ref = refs
        else:
            x_ref, w_ref, o_ref = refs
            b_ref = None
        acc = jnp.dot(x_ref[...], w_ref[...],
                      preferred_element_type=jnp.float32)
        if has_bias:
            acc = acc + b_ref[...].astype(jnp.float32)
        o_ref[...] = acc.astype(o_ref.dtype)
    return kernel


# ------------------------------ parameter prep -------------------------------

def _prep_weight_padded(wT, use_bf16):
    """Pad the already-transposed weight (in_f, out_f) -> (Kp, Np), cast once."""
    in_f, out_f = wT.shape
    _, _, _, Np, Kp, _ = _plan_nk(in_f, out_f, use_bf16)
    w = wT
    if Kp != in_f or Np != out_f:
        w = jnp.pad(w, ((0, Kp - in_f), (0, Np - out_f)))
    if use_bf16:
        w = w.astype(jnp.bfloat16)
    return w


def _prep_bias_padded(bias, out_f, Np):
    if bias is None:
        return None
    b = bias if Np == out_f else jnp.pad(bias, (0, Np - out_f))
    return b.reshape(1, Np).astype(jnp.float32)


# --------------------------------- wrappers -----------------------------------

def _linear_single_tile(x2, wT, bias, out_dtype, use_bf16):
    B, _ = x2.shape
    out_f = wT.shape[1]
    op_dtype = jnp.bfloat16 if use_bf16 else x2.dtype
    args = [x2.astype(op_dtype), wT.astype(op_dtype)]
    if bias is not None:
        args.append(bias.reshape(1, out_f).astype(jnp.float32))
    return pl.pallas_call(
        _make_single_tile_kernel(bias is not None),
        out_shape=jax.ShapeDtypeStruct((B, out_f), out_dtype),
    )(*args)


def _linear_tiled(x2, wT_p, b_p, out_dtype, out_f, use_bf16):
    B, in_f = x2.shape
    Kp, Np = wT_p.shape
    tm_cap, tn, tk, Np2, Kp2, vmem_limit = _plan_nk(in_f, out_f, use_bf16)
    assert (Np2, Kp2) == (Np, Kp), "weight was prepared with a different plan"

    m_align = 16 if use_bf16 else 8          # bf16 packs 16 rows / vreg
    tm = min(tm_cap, _round_up(B, m_align))
    Mp = _round_up(B, tm)

    op_dtype = jnp.bfloat16 if use_bf16 else x2.dtype
    xp = x2
    if Mp != B or Kp != in_f:
        xp = jnp.pad(x2, ((0, Mp - B), (0, Kp - in_f)))
    xp = xp.astype(op_dtype)

    grid = (Mp // tm, Np // tn, Kp // tk)
    has_bias = b_p is not None
    acc_in_out = (jnp.dtype(out_dtype) == jnp.dtype(jnp.float32))

    op_bytes = jnp.dtype(op_dtype).itemsize
    out_bytes = jnp.dtype(out_dtype).itemsize
    cost = pl.CostEstimate(
        flops=2 * Mp * Kp * Np,
        transcendentals=0,
        bytes_accessed=(grid[1] * Mp * Kp * op_bytes      # x re-read per N block
                        + grid[0] * Np * Kp * op_bytes    # w re-read per M block
                        + Mp * Np * out_bytes
                        + (Np * 4 if has_bias else 0)))

    in_specs = [pl.BlockSpec((tm, tk), lambda i, j, k: (i, k)),
                pl.BlockSpec((tk, tn), lambda i, j, k: (k, j))]
    args = [xp, wT_p]
    if has_bias:
        in_specs.append(pl.BlockSpec((1, tn), lambda i, j, k: (0, j)))
        args.append(b_p)
    out_spec = pl.BlockSpec((tm, tn), lambda i, j, k: (i, j))
    scratch = [] if acc_in_out else [pltpu.VMEM((tm, tn), jnp.float32)]

    out = pl.pallas_call(
        _make_gemm_kernel(has_bias, acc_in_out),
        out_shape=jax.ShapeDtypeStruct((Mp, Np), out_dtype),
        grid_spec=pltpu.PrefetchScalarGridSpec(
            num_scalar_prefetch=0,
            grid=grid,
            in_specs=in_specs,
            out_specs=out_spec,
            scratch_shapes=scratch),
        compiler_params=pltpu.CompilerParams(
            dimension_semantics=("parallel", "parallel", "arbitrary"),
            vmem_limit_bytes=vmem_limit),
        cost_estimate=cost,
    )(*args)
    return out[:B, :out_f]


def _forward_core(x, out_f, wT, wT_p, bias, b_p, use_bf16):
    orig_shape = x.shape
    in_f = orig_shape[-1]
    x2 = x.reshape(-1, in_f)
    B = x2.shape[0]
    out_dtype = x.dtype

    tm_cap, tn_cap, tk_cap, _ = _tile_caps(use_bf16)
    m_align = 16 if use_bf16 else 8
    single_tile = (_round_up(B, m_align) <= tm_cap
                   and _round_up(out_f, 128) <= tn_cap
                   and _round_up(in_f, 128) <= tk_cap)

    if single_tile:
        out2 = _linear_single_tile(x2, wT, bias, out_dtype, use_bf16)
    else:
        if wT_p is None:
            wT_p = _prep_weight_padded(wT, use_bf16)
        if b_p is None and bias is not None:
            _, _, _, Np, _, _ = _plan_nk(in_f, out_f, use_bf16)
            b_p = _prep_bias_padded(bias, out_f, Np)
        out2 = _linear_tiled(x2, wT_p, b_p, out_dtype, out_f, use_bf16)

    return out2.reshape(*orig_shape[:-1], out_f)


def linear_network_forward(x, weight, bias=None, *, use_bf16=False):
    """Equivalent of LinearNetwork.forward / F.linear.

    x:      (..., in_features)
    weight: (out_features, in_features)   -- PyTorch layout
    bias:   (out_features,) or None
    """
    out_f, in_f_w = weight.shape
    assert x.shape[-1] == in_f_w, "in_features mismatch between x and weight"
    wT = weight.T  # transpose once, outside the kernel (jit constant-folds it)
    return _forward_core(x, out_f, wT, None, bias, None, use_bf16)


class LinearNetworkPallas:
    """Mirror of the PyTorch LinearNetwork module."""

    def __init__(self, in_feature, out_feature, bias=True, key=None,
                 use_bf16=False):
        if key is None:
            key = jax.random.PRNGKey(0)
        kw, kb = jax.random.split(key)
        # Mimic torch.nn.Linear's U(-1/sqrt(in), 1/sqrt(in)) init.
        bound = 1.0 / (in_feature ** 0.5)
        self.weight = jax.random.uniform(
            kw, (out_feature, in_feature), jnp.float32, -bound, bound)
        self.has_bias = bias
        self.bias = (jax.random.uniform(
            kb, (out_feature,), jnp.float32, -bound, bound) if bias else None)
        self.use_bf16 = use_bf16
        self.out_feature = out_feature
        # Hoisted one-time prep: transpose (+pad/cast for the tiled path).
        self._wT = self.weight.T
        self._wT_p = _prep_weight_padded(self._wT, use_bf16)
        _, _, _, Np, _, _ = _plan_nk(in_feature, out_feature, use_bf16)
        self._bias_p = _prep_bias_padded(self.bias, out_feature, Np)

    def __call__(self, x, weights=None):
        if weights is None:
            return _forward_core(x, self.out_feature, self._wT, self._wT_p,
                                 self.bias, self._bias_p, self.use_bf16)
        elif self.has_bias:
            return linear_network_forward(x, weights[0], weights[1],
                                          use_bf16=self.use_bf16)
        else:
            return linear_network_forward(x, weights[0],
                                          use_bf16=self.use_bf16)


# ----------------------------------- Main -------------------------------------

if __name__ == "__main__":
    key = jax.random.PRNGKey(0)
    k_x, k_mod, k_w, k_b, k_x2, k_w2, k_b2 = jax.random.split(key, 7)
    hp = jax.lax.Precision.HIGHEST

    # ---- Small shapes (single-tile fast path) ----
    batch, in_feature, out_feature = 8, 32, 16
    x = jax.random.normal(k_x, (batch, in_feature), jnp.float32)
    net = LinearNetworkPallas(in_feature, out_feature, bias=True, key=k_mod)

    # Path 1: module parameters (weights=None branch)
    y1 = net(x)
    jax.block_until_ready(y1)

    # Path 2: external weights (F.linear(x, weights[0], weights[1]) branch)
    ext_w = jax.random.normal(k_w, (out_feature, in_feature), jnp.float32) * 0.1
    ext_b = jax.random.normal(k_b, (out_feature,), jnp.float32) * 0.1
    y2 = net(x, weights=(ext_w, ext_b))
    jax.block_until_ready(y2)

    # Path 3: no-bias network
    net_nb = LinearNetworkPallas(in_feature, out_feature, bias=False, key=k_mod)
    y3 = net_nb(x)
    jax.block_until_ready(y3)

    ref1 = jnp.dot(x, net.weight.T, precision=hp) + net.bias
    ref2 = jnp.dot(x, ext_w.T, precision=hp) + ext_b
    ref3 = jnp.dot(x, net_nb.weight.T, precision=hp)
    assert jnp.allclose(y1, ref1, atol=1e-5, rtol=1e-5)
    assert jnp.allclose(y2, ref2, atol=1e-5, rtol=1e-5)
    assert jnp.allclose(y3, ref3, atol=1e-5, rtol=1e-5)
    assert y1.shape == (batch, out_feature)
    assert y3.shape == (batch, out_feature)

    # ---- Larger shape: exercises the tiled grid + K accumulation path ----
    Bt, in_t, out_t = 24, 1300, 200
    xt = jax.random.normal(k_x2, (Bt, in_t), jnp.float32)
    wt = jax.random.normal(k_w2, (out_t, in_t), jnp.float32) * 0.03
    bt = jax.random.normal(k_b2, (out_t,), jnp.float32) * 0.1

    y4 = linear_network_forward(xt, wt, bt)
    jax.block_until_ready(y4)
    ref4 = jnp.dot(xt, wt.T, precision=hp) + bt
    assert jnp.allclose(y4, ref4, atol=2e-3, rtol=2e-3)
    assert y4.shape == (Bt, out_t)

    # bf16 operands + f32 accumulation (native MXU rate); looser tolerance
    # against the fp32 reference by design.
    y5 = linear_network_forward(xt, wt, bt, use_bf16=True)
    jax.block_until_ready(y5)
    assert jnp.allclose(y5, ref4, atol=1e-1, rtol=1e-1)

    print("KERNEL_OK")
</pallas_src>

<mosaic_0001>
module attributes {stable_mosaic.version = 11 : i64} {
  func.func @kernel(%arg0: memref<8x32xf32, #tpu.memory_space<vmem>>, %arg1: memref<32x16xf32, #tpu.memory_space<vmem>>, %arg2: memref<1x16xf32, #tpu.memory_space<vmem>>, %arg3: memref<8x16xf32, #tpu.memory_space<vmem>>) attributes {dimension_semantics = [], scalar_prefetch = 0 : i64, scratch_operands = 0 : i64, tpu.core_type = #tpu.core_type<tc>} {
    %c0 = arith.constant 0 : index
    %c0_0 = arith.constant 0 : index
    %0 = vector.load %arg0[%c0, %c0_0] : memref<8x32xf32, #tpu.memory_space<vmem>>, vector<8x32xf32>
    %c0_1 = arith.constant 0 : index
    %c0_2 = arith.constant 0 : index
    %1 = vector.load %arg1[%c0_1, %c0_2] : memref<32x16xf32, #tpu.memory_space<vmem>>, vector<32x16xf32>
    %cst = arith.constant dense<0.000000e+00> : vector<8x16xf32>
    %2 = tpu.matmul %0, %1, %cst {dimension_numbers = #tpu.dot_dimension_numbers<[1], [0], [0], [1], [0, 0, 1, 1], [], []>} : vector<8x32xf32>, vector<32x16xf32>, vector<8x16xf32> -> vector<8x16xf32>
    %c0_3 = arith.constant 0 : index
    %c0_4 = arith.constant 0 : index
    %3 = vector.load %arg2[%c0_3, %c0_4] : memref<1x16xf32, #tpu.memory_space<vmem>>, vector<1x16xf32>
    %4 = vector.broadcast %3 : vector<1x16xf32> to vector<8x16xf32>
    %5 = arith.addf %2, %4 : vector<8x16xf32>
    %c0_5 = arith.constant 0 : index
    %c0_6 = arith.constant 0 : index
    %6 = vector.load %arg3[%c0_5, %c0_6] : memref<8x16xf32, #tpu.memory_space<vmem>>, vector<8x16xf32>
    tpu.vector_store %arg3[%c0_5, %c0_6], %5 {strides = array<i32>} : memref<8x16xf32, #tpu.memory_space<vmem>>, vector<8x16xf32>,
    return
  }
}

</mosaic_0001>

<llo_original>
// kernel: tpu_custom_call.1
$region0: #{tpu_custom_call.1}
  #allocation0 [shape = 'u32[]', space=smem, size = 0x4, offset = 0x4, fixed_abs, tag = 'smem constant byte address 0x4 - core index']
  #allocation1 [shape = 'u32[144,128]{1,0:T(1,128)}', space=vmem, size = 0x12000, scoped, tag = 'internal scratch']
  %s0 = inlined_call_operand.vmem [shape: f32[8,32], index: 0, kind: input, shape index: {}]
  %s1 = inlined_call_operand.vmem [shape: f32[32,16], index: 1, kind: input, shape index: {}]
  %s2 = inlined_call_operand.vmem [shape: f32[1,16], index: 2, kind: input, shape index: {}]
  %s3 = inlined_call_operand.hbm [shape: f32[8,16], index: 3, kind: output, shape index: {}]
  %s4 = sld [smem:[#allocation0]]
  $region22: #{tpu_custom_call.1} parent=0
    _
  %s6 = ssub.s32 1, %s4
  %s7 = scalar_select 0, %s6, %s4
  $region1: #{tpu_custom_call.1} parent=0
    #allocation2 [shape = 'u8[4096]{0}', space=vmem, size = 0x1000, scoped, tag = 'output window, operand 0, single buffered']
    #allocation3 [shape = 's32[1]{0}', space=sflag, size = 0x4, scoped, tag = 'scoped memory for tpu_custom_call.1']
    %8 = vsyncpa [#allocation3], 0
    // Predicated region
    $region2: #{tpu_custom_call.1} parent=1 // pred_check
      _
    $region3: #{tpu_custom_call.1} parent=1 // pred_check_branch
      %10 = sbr.rel (0) target = $region5
    $region4: #{tpu_custom_call.1} parent=1 // pred_region
      _
    $region5: #{tpu_custom_call.1} parent=1 // pred_fallthru
      _
    // Predicated region
    $region6: #{tpu_custom_call.1} parent=1 // pred_check
      _
    $region7: #{tpu_custom_call.1} parent=1 // pred_check_branch
      %12 = sbr.rel (0) target = $region9
    $region8: #{tpu_custom_call.1} parent=1 // pred_region
      _
    $region9: #{tpu_custom_call.1} parent=1 // pred_fallthru
      _
    // Predicated region
    $region10: #{tpu_custom_call.1} parent=1 // pred_check
      _
    $region11: #{tpu_custom_call.1} parent=1 // pred_check_branch
      %14 = sbr.rel (0) target = $region13
    $region12: #{tpu_custom_call.1} parent=1 // pred_region
      _
    $region13: #{tpu_custom_call.1} parent=1 // pred_fallthru
      _
    %v15 = vld [vmem:[%s0] sm:$0xff]
    %v16 = vld [vmem:[%s1] sm:$0xff]
    %v17 = vld [vmem:[%s1 + $0x8] sm:$0xff]
    %v18 = vld [vmem:[%s1 + $0x10] sm:$0xff]
    %v19 = vld [vmem:[%s1 + $0x18] sm:$0xff]
    %v20 = vld [vmem:[%s2] sm:$0x1]
    %v22 = vlaneseq
    %v23 = vshrl.u32 %v22, 7
    %v24 = vsub.s32 0, %v23
    %v25 = vrot.slane %v20, %v24
    %vm27 = vcmask 261120
    %v29 = vsel %vm27, %v15, 0
    %31 = vmatprep.subr.mxu0 0.0
    %32 = vmatpush1.msra.mxu0 0.0
    %33 = vmatprep.subr.mxu0 0.0
    %34 = vmatpush1.msra.mxu0 0.0
    %35 = vmatprep.subr.mxu0 0.0
    %36 = vmatpush1.msra.mxu0 0.0
    %37 = vmatprep.subr.mxu0 0.0
    %38 = vmatpush1.msra.mxu0 0.0
    %39 = vmatprep.subr.mxu0 0.0
    %40 = vmatpush1.msra.mxu0 0.0
    %41 = vmatprep.subr.mxu0 0.0
    %42 = vmatpush1.msra.mxu0 0.0
    %43 = vmatprep.subr.mxu0 0.0
    %44 = vmatpush1.msra.mxu0 0.0
    %45 = vmatprep.subr.mxu0 0.0
    %46 = vmatpush1.msra.mxu0 0.0
    %47 = vmatprep.subr.mxu0 0.0
    %48 = vmatpush1.msra.mxu0 0.0
    %49 = vmatprep.subr.mxu0 0.0
    %50 = vmatpush1.msra.mxu0 0.0
    %51 = vmatprep.subr.mxu0 0.0
    %52 = vmatpush1.msra.mxu0 0.0
    %53 = vmatprep.subr.mxu0 0.0
    %54 = vmatpush1.msra.mxu0 0.0
    %55 = vmatprep.subr.mxu0 0.0
    %56 = vmatpush1.msra.mxu0 %v19
    %57 = vmatprep.subr.mxu0 0.0
    %58 = vmatpush1.msra.mxu0 %v18
    %59 = vmatprep.subr.mxu0 0.0
    %60 = vmatpush1.msra.mxu0 %v17
    %61 = vmatprep.subr.mxu0 0.0
    %62 = vmatpush1.msra.mxu0 %v16
    %63 = vmatprep.subr.mxu0 0.0
    %64 = vmatpush2.msra.mxu0 0.0
    %65 = vmatprep.subr.mxu0 0.0
    %66 = vmatpush2.msra.mxu0 0.0
    %67 = vmatprep.subr.mxu0 0.0
    %68 = vmatpush2.msra.mxu0 0.0
    %69 = vmatprep.subr.mxu0 0.0
    %70 = vmatpush2.msra.mxu0 0.0
    %71 = vmatprep.subr.mxu0 0.0
    %72 = vmatpush2.msra.mxu0 0.0
    %73 = vmatprep.subr.mxu0 0.0
    %74 = vmatpush2.msra.mxu0 0.0
    %75 = vmatprep.subr.mxu0 0.0
    %76 = vmatpush2.msra.mxu0 0.0
    %77 = vmatprep.subr.mxu0 0.0
    %78 = vmatpush2.msra.mxu0 0.0
    %79 = vmatprep.subr.mxu0 0.0
    %80 = vmatpush2.msra.mxu0 0.0
    %81 = vmatprep.subr.mxu0 0.0
    %82 = vmatpush2.msra.mxu0 0.0
    %83 = vmatprep.subr.mxu0 0.0
    %84 = vmatpush2.msra.mxu0 0.0
    %85 = vmatprep.subr.mxu0 0.0
    %86 = vmatpush2.msra.mxu0 0.0
    %87 = vmatprep.subr.mxu0 0.0
    %88 = vmatpush2.msra.mxu0 0.0
    %89 = vmatprep.subr.mxu0 0.0
    %90 = vmatpush2.msra.mxu0 0.0
    %91 = vmatprep.subr.mxu0 0.0
    %92 = vmatpush2.msra.mxu0 0.0
    %93 = vmatprep.subr.mxu0 0.0
    %94 = vmatpush2.msra.mxu0 0.0
    %95 = vmatprep.mubr.f32.mxu0 0.0
    %96 = vmatmul.mubr.f32.gmra.mxu0 %v29
    %v97 = vpop.f32.mrf.mxu0
    %v98 = vadd.f32 %v25, %v97
    %v99 = vpop.f32.mrf.mxu0
    %100 = vdwg.mxu0
    %vm101 = vcmask 130048
    %102 = vst.msk [vmem:[#allocation2] sm:$0xff] %vm101, %v98
    // Predicated region
    $region14: #{tpu_custom_call.1} parent=1 // pred_check
      _
    $region15: #{tpu_custom_call.1} parent=1 // pred_check_branch
      %104 = sbr.rel (0) target = $region17
    $region16: #{tpu_custom_call.1} parent=1 // pred_region
      %s106 = ssub.s32 128, 128
      %107 = vsyncadd [#allocation3], %s106
      %s109 = sshll.u32 [#allocation2], 4
      %s110 = int_to_ptr.vmem [resolvable:$true] %s109
      %112 = dma.vmem_to_hbm [thread:$0]  %s110, 128, %s3, [#allocation3]
    $region17: #{tpu_custom_call.1} parent=1 // pred_fallthru
      _
    // Predicated region
    $region18: #{tpu_custom_call.1} parent=1 // pred_check
      _
    $region19: #{tpu_custom_call.1} parent=1 // pred_check_branch
      %114 = sbr.rel (0) target = $region21
    $region20: #{tpu_custom_call.1} parent=1 // pred_region
      %115 = dma.done [#allocation3], 128
    $region21: #{tpu_custom_call.1} parent=1 // pred_fallthru
      _
    %116 = vsyncpa [#allocation3], 1

</llo_original>
